<compile_context>
chip_gen: v7x
topology: tpu7x:2x2x1
jax: 0.10.0
libtpu: 0.0.40
codegen_flags: <defaults>
</compile_context>

<pallas_src>
import functools

import jax
import jax.numpy as jnp
from jax import lax
from jax.experimental import pallas as pl
from jax.experimental.pallas import tpu as pltpu

LANE = 128                      # vreg lane width
SUBLANE_F32 = 8                 # f32 sublane count
_MIN_ROWS_FOR_TC_SPLIT = 1024   # force >=2 grid steps above this (v7x dual-TC)


def _round_up(x, m):
    return ((x + m - 1) // m) * m


def _pad_to(a, shape):
    pads = [(0, t - s) for s, t in zip(a.shape, shape)]
    if all(p == (0, 0) for p in pads):
        return a
    return jnp.pad(a, pads)


def dqn_kernel(x_ref, w1_ref, b1_ref, w2t_ref, b2_ref, ot_ref):
    # Layer 1 on the MXU: (tile_b, in) @ (in, 128) -> f32; bias + ReLU on the VPU.
    h = jnp.dot(x_ref[...], w1_ref[...], preferred_element_type=jnp.float32)
    h = jnp.maximum(h + b1_ref[...], 0.0)
    # Layer 2, produced transposed: (out, 128) x (tile_b, 128)^T -> (out, tile_b).
    # Storing y^T keeps the output lane-dense along batch (tile_rows is a lane
    # multiple for multi-tile grids) instead of writing a 128-lane zero-padded
    # (tile_b, 128) f32 block -- ~32x fewer output HBM bytes.
    yt = lax.dot_general(
        w2t_ref[...], h,
        dimension_numbers=(((1,), (1,)), ((), ())),
        preferred_element_type=jnp.float32,
    )
    ot_ref[...] = yt + b2_ref[...]


def prepare_dqn_params(w1, b1, w2, b2):
    """Pad / lay out parameters once, outside the per-step hot path.

    w1: (in, hidden), b1: (1, hidden) or (hidden,), w2: (hidden, out),
    b2: (1, out) or (out,). Hidden is zero-padded to a lane multiple (64 -> 128)
    and W2 is stored transposed so the kernel emits y^T directly.
    """
    in_size, hidden = w1.shape
    out_size = w2.shape[-1]
    h_pad = _round_up(hidden, LANE)
    w1_p = _pad_to(jnp.asarray(w1, jnp.float32), (in_size, h_pad))
    b1_p = _pad_to(jnp.asarray(b1, jnp.float32).reshape(1, hidden), (1, h_pad))
    w2t_p = _pad_to(jnp.asarray(w2, jnp.float32).T, (out_size, h_pad))
    b2_p = jnp.asarray(b2, jnp.float32).reshape(out_size, 1)
    return w1_p, b1_p, w2t_p, b2_p


@functools.partial(jax.jit, static_argnames=("tile_b",))
def dqn_forward(x, w1_p, b1_p, w2t_p, b2_p, tile_b=4096):
    """y = relu(x @ W1 + b1) @ W2 + b2, with params pre-laid-out by prepare_dqn_params."""
    batch, in_size = x.shape
    h_pad = w1_p.shape[1]
    out_size = w2t_p.shape[0]

    # Batch tiling: at most ~one alignment block of padding per tile, and at
    # least 2 (even) grid steps for large batches so both v7x TensorCores get
    # work under dimension_semantics=("parallel",).
    num_tiles = pl.cdiv(batch, tile_b)
    if batch >= _MIN_ROWS_FOR_TC_SPLIT:
        num_tiles = max(num_tiles, 2)
        num_tiles += num_tiles % 2
    row_align = LANE if num_tiles > 1 else SUBLANE_F32
    tile_rows = _round_up(pl.cdiv(batch, num_tiles), row_align)
    b_pad = num_tiles * tile_rows

    x_p = _pad_to(x, (b_pad, in_size))  # no-op for aligned batch sizes

    cost = pl.CostEstimate(
        flops=2 * b_pad * h_pad * (in_size + out_size),
        transcendentals=0,
        bytes_accessed=(x_p.size * x_p.dtype.itemsize
                        + (w1_p.size + b1_p.size + w2t_p.size + b2_p.size) * 4
                        + out_size * b_pad * 4),
    )

    out_t = pl.pallas_call(
        dqn_kernel,
        out_shape=jax.ShapeDtypeStruct((out_size, b_pad), jnp.float32),
        grid=(num_tiles,),
        in_specs=[
            pl.BlockSpec((tile_rows, in_size), lambda i: (i, 0)),   # x: batch-tiled
            pl.BlockSpec((in_size, h_pad), lambda i: (0, 0)),       # W1: resident
            pl.BlockSpec((1, h_pad), lambda i: (0, 0)),             # b1: resident
            pl.BlockSpec((out_size, h_pad), lambda i: (0, 0)),      # W2^T: resident
            pl.BlockSpec((out_size, 1), lambda i: (0, 0)),          # b2: resident
        ],
        out_specs=pl.BlockSpec((out_size, tile_rows), lambda i: (0, i)),
        compiler_params=pltpu.CompilerParams(
            dimension_semantics=("parallel",),
        ),
        cost_estimate=cost,
    )(x_p, w1_p, b1_p, w2t_p, b2_p)

    # (out, b_pad) -> (batch, out): tiny (out_size x batch) slice + transpose,
    # instead of re-reading a 128-lane padded (b_pad, 128) f32 array.
    return out_t[:, :batch].T


def init_dqn_params(key, input_size, hidden_size, output_size):
    # Deterministic init mimicking PyTorch's default uniform(-1/sqrt(fan_in), 1/sqrt(fan_in)).
    k1, k2, k3, k4 = jax.random.split(key, 4)
    bound1 = 1.0 / jnp.sqrt(jnp.float32(input_size))
    bound2 = 1.0 / jnp.sqrt(jnp.float32(hidden_size))
    w1 = jax.random.uniform(k1, (input_size, hidden_size), jnp.float32, -bound1, bound1)
    b1 = jax.random.uniform(k2, (1, hidden_size), jnp.float32, -bound1, bound1)
    w2 = jax.random.uniform(k3, (hidden_size, output_size), jnp.float32, -bound2, bound2)
    b2 = jax.random.uniform(k4, (1, output_size), jnp.float32, -bound2, bound2)
    return w1, b1, w2, b2


if __name__ == "__main__":
    # Shapes consistent with the DQN over sensor readings:
    # input_size=8 (IR sensors), hidden=64 (fixed by the module), output_size=4 (actions).
    batch, input_size, hidden_size, output_size = 2, 8, 64, 4

    key = jax.random.PRNGKey(0)
    kx, kp = jax.random.split(key)
    x = jax.random.normal(kx, (batch, input_size), jnp.float32)
    w1, b1, w2, b2 = init_dqn_params(kp, input_size, hidden_size, output_size)

    params = prepare_dqn_params(w1, b1, w2, b2)  # one-time layout, outside hot path

    out = jax.block_until_ready(dqn_forward(x, *params))
    assert out.shape == (batch, output_size)
    ref = jnp.maximum(x @ w1 + b1, 0.0) @ w2 + b2
    assert jnp.allclose(out, ref, atol=1e-4, rtol=1e-4)

    # Also exercise the multi-tile (>= 2 grid steps, padded-batch) path.
    xb = jax.random.normal(kx, (1030, input_size), jnp.float32)
    outb = jax.block_until_ready(dqn_forward(xb, *params))
    refb = jnp.maximum(xb @ w1 + b1, 0.0) @ w2 + b2
    assert outb.shape == (1030, output_size)
    assert jnp.allclose(outb, refb, atol=1e-4, rtol=1e-4)

    print("KERNEL_OK")
</pallas_src>

<mosaic_0001>
module attributes {stable_mosaic.version = 11 : i64} {
  func.func @dqn_kernel(%arg0: i32, %arg1: memref<8x8xf32, #tpu.memory_space<vmem>>, %arg2: memref<8x128xf32, #tpu.memory_space<vmem>>, %arg3: memref<1x128xf32, #tpu.memory_space<vmem>>, %arg4: memref<4x128xf32, #tpu.memory_space<vmem>>, %arg5: memref<4x1xf32, #tpu.memory_space<vmem>>, %arg6: memref<4x8xf32, #tpu.memory_space<vmem>>) attributes {dimension_semantics = [#tpu.dimension_semantics<parallel>], iteration_bounds = array<i64: 1>, scalar_prefetch = 0 : i64, scratch_operands = 0 : i64, tpu.core_type = #tpu.core_type<tc>, window_params = [{transform_indices = @transform_0, window_bounds = array<i64: 8, 8>}, {pipeline_mode = #tpu.pipeline_mode<synchronous>, transform_indices = @transform_1, window_bounds = array<i64: 8, 128>}, {pipeline_mode = #tpu.pipeline_mode<synchronous>, transform_indices = @transform_2, window_bounds = array<i64: 1, 128>}, {pipeline_mode = #tpu.pipeline_mode<synchronous>, transform_indices = @transform_3, window_bounds = array<i64: 4, 128>}, {pipeline_mode = #tpu.pipeline_mode<synchronous>, transform_indices = @transform_4, window_bounds = array<i64: 4, 1>}, {transform_indices = @transform_5, window_bounds = array<i64: 4, 8>}]} {
    %c0 = arith.constant 0 : index
    %c0_0 = arith.constant 0 : index
    %0 = vector.load %arg1[%c0, %c0_0] : memref<8x8xf32, #tpu.memory_space<vmem>>, vector<8x8xf32>
    %c0_1 = arith.constant 0 : index
    %c0_2 = arith.constant 0 : index
    %1 = vector.load %arg2[%c0_1, %c0_2] : memref<8x128xf32, #tpu.memory_space<vmem>>, vector<8x128xf32>
    %cst = arith.constant dense<0.000000e+00> : vector<8x128xf32>
    %2 = tpu.matmul %0, %1, %cst {dimension_numbers = #tpu.dot_dimension_numbers<[1], [0], [0], [1], [0, 0, 1, 1], [], []>} : vector<8x8xf32>, vector<8x128xf32>, vector<8x128xf32> -> vector<8x128xf32>
    %c0_3 = arith.constant 0 : index
    %c0_4 = arith.constant 0 : index
    %3 = vector.load %arg3[%c0_3, %c0_4] : memref<1x128xf32, #tpu.memory_space<vmem>>, vector<1x128xf32>
    %4 = vector.broadcast %3 : vector<1x128xf32> to vector<8x128xf32>
    %5 = arith.addf %2, %4 : vector<8x128xf32>
    %cst_5 = arith.constant 0.000000e+00 : f32
    %6 = vector.broadcast %cst_5 : f32 to vector<8x128xf32>
    %7 = arith.maximumf %5, %6 : vector<8x128xf32>
    %c0_6 = arith.constant 0 : index
    %c0_7 = arith.constant 0 : index
    %8 = vector.load %arg4[%c0_6, %c0_7] : memref<4x128xf32, #tpu.memory_space<vmem>>, vector<4x128xf32>
    %cst_8 = arith.constant dense<0.000000e+00> : vector<4x8xf32>
    %9 = tpu.matmul %8, %7, %cst_8 {dimension_numbers = #tpu.dot_dimension_numbers<[1], [1], [0], [0], [0, 0, 1, 0], [], []>} : vector<4x128xf32>, vector<8x128xf32>, vector<4x8xf32> -> vector<4x8xf32>
    %c0_9 = arith.constant 0 : index
    %c0_10 = arith.constant 0 : index
    %10 = vector.load %arg5[%c0_9, %c0_10] : memref<4x1xf32, #tpu.memory_space<vmem>>, vector<4x1xf32>
    %11 = vector.broadcast %10 : vector<4x1xf32> to vector<4x8xf32>
    %12 = arith.addf %9, %11 : vector<4x8xf32>
    %c0_11 = arith.constant 0 : index
    %c0_12 = arith.constant 0 : index
    %13 = vector.load %arg6[%c0_11, %c0_12] : memref<4x8xf32, #tpu.memory_space<vmem>>, vector<4x8xf32>
    tpu.vector_store %arg6[%c0_11, %c0_12], %12 {strides = array<i32>} : memref<4x8xf32, #tpu.memory_space<vmem>>, vector<4x8xf32>,
    return
  }
  func.func @transform_0(%arg0: i32) -> (i32, i32) {
    %c0_i32 = arith.constant 0 : i32
    %c0_i32_0 = arith.constant 0 : i32
    return %arg0, %c0_i32 : i32, i32
  }
  func.func @transform_1(%arg0: i32) -> (i32, i32) {
    %c0_i32 = arith.constant 0 : i32
    %c0_i32_0 = arith.constant 0 : i32
    %c0_i32_1 = arith.constant 0 : i32
    return %c0_i32, %c0_i32_0 : i32, i32
  }
  func.func @transform_2(%arg0: i32) -> (i32, i32) {
    %c0_i32 = arith.constant 0 : i32
    %c0_i32_0 = arith.constant 0 : i32
    %c0_i32_1 = arith.constant 0 : i32
    return %c0_i32, %c0_i32_0 : i32, i32
  }
  func.func @transform_3(%arg0: i32) -> (i32, i32) {
    %c0_i32 = arith.constant 0 : i32
    %c0_i32_0 = arith.constant 0 : i32
    %c0_i32_1 = arith.constant 0 : i32
    return %c0_i32, %c0_i32_0 : i32, i32
  }
  func.func @transform_4(%arg0: i32) -> (i32, i32) {
    %c0_i32 = arith.constant 0 : i32
    %c0_i32_0 = arith.constant 0 : i32
    %c0_i32_1 = arith.constant 0 : i32
    return %c0_i32, %c0_i32_0 : i32, i32
  }
  func.func @transform_5(%arg0: i32) -> (i32, i32) {
    %c0_i32 = arith.constant 0 : i32
    %c0_i32_0 = arith.constant 0 : i32
    return %c0_i32, %arg0 : i32, i32
  }
}

</mosaic_0001>

<llo_original>
// kernel: dqn_forward.1
$region0: #{dqn_forward.1}
  #allocation0 [shape = 'u32[]', space=smem, size = 0x4, offset = 0x4, fixed_abs, tag = 'smem constant byte address 0x4 - core index']
  #allocation1 [shape = 'u32[144,128]{1,0:T(1,128)}', space=vmem, size = 0x12000, scoped, tag = 'internal scratch']
  %s0 = inlined_call_operand.vmem [shape: f32[8,8], index: 0, kind: input, shape index: {}]
  %s1 = inlined_call_operand.vmem [shape: f32[8,128], index: 1, kind: input, shape index: {}]
  %s2 = inlined_call_operand.vmem [shape: f32[1,128], index: 2, kind: input, shape index: {}]
  %s3 = inlined_call_operand.vmem [shape: f32[4,128], index: 3, kind: input, shape index: {}]
  %s4 = inlined_call_operand.vmem [shape: f32[4,1], index: 4, kind: input, shape index: {}]
  %s5 = inlined_call_operand.vmem [shape: f32[4,8], index: 5, kind: output, shape index: {}]
  %s6 = sld [smem:[#allocation0]]
  $region30: #{dqn_forward.1} parent=0
    _
  %s8 = ssub.s32 1, %s6
  %s9 = scalar_select 0, %s8, %s6
  // Predicated region
  $region2: #{dqn_forward.1} parent=0 // pred_check
    _
  $region3: #{dqn_forward.1} parent=0 // pred_check_branch
    %11 = sbr.rel (0) target = $region5
  $region4: #{dqn_forward.1} parent=0 // pred_region
    _
  $region5: #{dqn_forward.1} parent=0 // pred_fallthru
    _
  // Predicated region
  $region6: #{dqn_forward.1} parent=0 // pred_check
    _
  $region7: #{dqn_forward.1} parent=0 // pred_check_branch
    %13 = sbr.rel (0) target = $region9
  $region8: #{dqn_forward.1} parent=0 // pred_region
    _
  $region9: #{dqn_forward.1} parent=0 // pred_fallthru
    _
  // Predicated region
  $region10: #{dqn_forward.1} parent=0 // pred_check
    _
  $region11: #{dqn_forward.1} parent=0 // pred_check_branch
    %15 = sbr.rel (0) target = $region13
  $region12: #{dqn_forward.1} parent=0 // pred_region
    _
  $region13: #{dqn_forward.1} parent=0 // pred_fallthru
    _
  // Predicated region
  $region14: #{dqn_forward.1} parent=0 // pred_check
    _
  $region15: #{dqn_forward.1} parent=0 // pred_check_branch
    %17 = sbr.rel (0) target = $region17
  $region16: #{dqn_forward.1} parent=0 // pred_region
    _
  $region17: #{dqn_forward.1} parent=0 // pred_fallthru
    _
  // Predicated region
  $region18: #{dqn_forward.1} parent=0 // pred_check
    _
  $region19: #{dqn_forward.1} parent=0 // pred_check_branch
    %19 = sbr.rel (0) target = $region21
  $region20: #{dqn_forward.1} parent=0 // pred_region
    _
  $region21: #{dqn_forward.1} parent=0 // pred_fallthru
    _
  %v20 = vld [vmem:[%s0] sm:$0xff]
  %v21 = vld [vmem:[%s1] sm:$0xff]
  %v22 = vld [vmem:[%s2] sm:$0x1]
  %v24 = vlaneseq
  %v25 = vshrl.u32 %v24, 7
  %v26 = vsub.s32 0, %v25
  %v27 = vrot.slane %v22, %v26
  %vm29 = vcmask 64512
  %v31 = vsel %vm29, %v20, 0
  %33 = vmatprep.subr.mxu0 0.0
  %34 = vmatpush1.msra.mxu0 %v21
  %35 = vmatprep.subr.mxu0 0.0
  %36 = vmatpush1.msra.mxu0 0.0
  %37 = vmatprep.subr.mxu0 0.0
  %38 = vmatpush1.msra.mxu0 0.0
  %39 = vmatprep.subr.mxu0 0.0
  %40 = vmatpush1.msra.mxu0 0.0
  %41 = vmatprep.subr.mxu0 0.0
  %42 = vmatpush1.msra.mxu0 0.0
  %43 = vmatprep.subr.mxu0 0.0
  %44 = vmatpush1.msra.mxu0 0.0
  %45 = vmatprep.subr.mxu0 0.0
  %46 = vmatpush1.msra.mxu0 0.0
  %47 = vmatprep.subr.mxu0 0.0
  %48 = vmatpush1.msra.mxu0 0.0
  %49 = vmatprep.subr.mxu0 0.0
  %50 = vmatpush1.msra.mxu0 0.0
  %51 = vmatprep.subr.mxu0 0.0
  %52 = vmatpush1.msra.mxu0 0.0
  %53 = vmatprep.subr.mxu0 0.0
  %54 = vmatpush1.msra.mxu0 0.0
  %55 = vmatprep.subr.mxu0 0.0
  %56 = vmatpush1.msra.mxu0 0.0
  %57 = vmatprep.subr.mxu0 0.0
  %58 = vmatpush1.msra.mxu0 0.0
  %59 = vmatprep.subr.mxu0 0.0
  %60 = vmatpush1.msra.mxu0 0.0
  %61 = vmatprep.subr.mxu0 0.0
  %62 = vmatpush1.msra.mxu0 0.0
  %63 = vmatprep.subr.mxu0 0.0
  %64 = vmatpush1.msra.mxu0 0.0
  %65 = vmatprep.subr.mxu0 0.0
  %66 = vmatpush1.msra.mxu0 0.0
  %67 = vmatprep.subr.mxu0 0.0
  %68 = vmatpush1.msra.mxu0 0.0
  %69 = vmatprep.subr.mxu0 0.0
  %70 = vmatpush1.msra.mxu0 0.0
  %71 = vmatprep.subr.mxu0 0.0
  %72 = vmatpush1.msra.mxu0 0.0
  %73 = vmatprep.subr.mxu0 0.0
  %74 = vmatpush1.msra.mxu0 0.0
  %75 = vmatprep.subr.mxu0 0.0
  %76 = vmatpush1.msra.mxu0 0.0
  %77 = vmatprep.subr.mxu0 0.0
  %78 = vmatpush1.msra.mxu0 0.0
  %79 = vmatprep.subr.mxu0 0.0
  %80 = vmatpush1.msra.mxu0 0.0
  %81 = vmatprep.subr.mxu0 0.0
  %82 = vmatpush1.msra.mxu0 0.0
  %83 = vmatprep.subr.mxu0 0.0
  %84 = vmatpush1.msra.mxu0 0.0
  %85 = vmatprep.subr.mxu0 0.0
  %86 = vmatpush1.msra.mxu0 0.0
  %87 = vmatprep.subr.mxu0 0.0
  %88 = vmatpush1.msra.mxu0 0.0
  %89 = vmatprep.subr.mxu0 0.0
  %90 = vmatpush1.msra.mxu0 0.0
  %91 = vmatprep.subr.mxu0 0.0
  %92 = vmatpush1.msra.mxu0 0.0
  %93 = vmatprep.subr.mxu0 0.0
  %94 = vmatpush1.msra.mxu0 0.0
  %95 = vmatprep.subr.mxu0 0.0
  %96 = vmatpush1.msra.mxu0 0.0
  %97 = vmatprep.mubr.f32.mxu0 0.0
  %98 = vmatmul.mubr.f32.gmra.mrb[0].mxu0 %v31
  %v99 = vpop.f32.mrb[0].mxu0
  %v100 = vadd.f32 %v27, %v99
  %v101 = vpop.f32.mrb[0].mxu0
  %102 = vdwg.mxu0
  %v103 = vmax.f32 %v100, 0.0
  %v104 = vld [vmem:[%s3] sm:$0xf]
  %v105 = vld [vmem:[%s4] sm:$0xf]
  %107 = vset.pattern.permute.xlu0 0
  %108 = vperm.xlu0 %107, %v105
  %v109 = vpop.permute.xlu0 %108
  %111 = vmatprep.subr.mxu0 0.0
  %112 = vmatpush1.xpose.msra.mxu0 %v103
  %113 = vmatprep.subr.mxu0 0.0
  %114 = vmatpush1.xpose.msra.mxu0 0.0
  %115 = vmatprep.subr.mxu0 0.0
  %116 = vmatpush1.xpose.msra.mxu0 0.0
  %117 = vmatprep.subr.mxu0 0.0
  %118 = vmatpush1.xpose.msra.mxu0 0.0
  %119 = vmatprep.subr.mxu0 0.0
  %120 = vmatpush1.xpose.msra.mxu0 0.0
  %121 = vmatprep.subr.mxu0 0.0
  %122 = vmatpush1.xpose.msra.mxu0 0.0
  %123 = vmatprep.subr.mxu0 0.0
  %124 = vmatpush1.xpose.msra.mxu0 0.0
  %125 = vmatprep.subr.mxu0 0.0
  %126 = vmatpush1.xpose.msra.mxu0 0.0
  %127 = vmatprep.subr.mxu0 0.0
  %128 = vmatpush1.xpose.msra.mxu0 0.0
  %129 = vmatprep.subr.mxu0 0.0
  %130 = vmatpush1.xpose.msra.mxu0 0.0
  %131 = vmatprep.subr.mxu0 0.0
  %132 = vmatpush1.xpose.msra.mxu0 0.0
  %133 = vmatprep.subr.mxu0 0.0
  %134 = vmatpush1.xpose.msra.mxu0 0.0
  %135 = vmatprep.subr.mxu0 0.0
  %136 = vmatpush1.xpose.msra.mxu0 0.0
  %137 = vmatprep.subr.mxu0 0.0
  %138 = vmatpush1.xpose.msra.mxu0 0.0
  %139 = vmatprep.subr.mxu0 0.0
  %140 = vmatpush1.xpose.msra.mxu0 0.0
  %141 = vmatprep.subr.mxu0 0.0
  %142 = vmatpush1.xpose.msra.mxu0 0.0
  %143 = vmatprep.subr.mxu0 0.0
  %144 = vmatpush1.xpose.msra.mxu0 0.0
  %145 = vmatprep.subr.mxu0 0.0
  %146 = vmatpush1.xpose.msra.mxu0 0.0
  %147 = vmatprep.subr.mxu0 0.0
  %148 = vmatpush1.xpose.msra.mxu0 0.0
  %149 = vmatprep.subr.mxu0 0.0
  %150 = vmatpush1.xpose.msra.mxu0 0.0
  %151 = vmatprep.subr.mxu0 0.0
  %152 = vmatpush1.xpose.msra.mxu0 0.0
  %153 = vmatprep.subr.mxu0 0.0
  %154 = vmatpush1.xpose.msra.mxu0 0.0
  %155 = vmatprep.subr.mxu0 0.0
  %156 = vmatpush1.xpose.msra.mxu0 0.0
  %157 = vmatprep.subr.mxu0 0.0
  %158 = vmatpush1.xpose.msra.mxu0 0.0
  %159 = vmatprep.subr.mxu0 0.0
  %160 = vmatpush1.xpose.msra.mxu0 0.0
  %161 = vmatprep.subr.mxu0 0.0
  %162 = vmatpush1.xpose.msra.mxu0 0.0
  %163 = vmatprep.subr.mxu0 0.0
  %164 = vmatpush1.xpose.msra.mxu0 0.0
  %165 = vmatprep.subr.mxu0 0.0
  %166 = vmatpush1.xpose.msra.mxu0 0.0
  %167 = vmatprep.subr.mxu0 0.0
  %168 = vmatpush1.xpose.msra.mxu0 0.0
  %169 = vmatprep.subr.mxu0 0.0
  %170 = vmatpush1.xpose.msra.mxu0 0.0
  %171 = vmatprep.subr.mxu0 0.0
  %172 = vmatpush1.xpose.msra.mxu0 0.0
  %173 = vmatprep.subr.mxu0 0.0
  %174 = vmatpush1.xpose.msra.mxu0 0.0
  %175 = vmatprep.mubr.f32.mxu0 0.0
  %176 = vmatmul.mubr.f32.gmra.mrb[0].mxu0 %v104
  %v177 = vpop.f32.mrb[0].mxu0
  %v178 = vadd.f32 %v109, %v177
  %v179 = vpop.f32.mrb[0].mxu0
  %180 = vdwg.mxu0
  %vm181 = vcmask 60416
  %182 = vst.msk [vmem:[%s5] sm:$0xf] %vm181, %v178
  // Predicated region
  $region22: #{dqn_forward.1} parent=0 // pred_check
    _
  $region23: #{dqn_forward.1} parent=0 // pred_check_branch
    %184 = sbr.rel (0) target = $region25
  $region24: #{dqn_forward.1} parent=0 // pred_region
    _
  $region25: #{dqn_forward.1} parent=0 // pred_fallthru
    _
  // Predicated region
  $region26: #{dqn_forward.1} parent=0 // pred_check
    _
  $region27: #{dqn_forward.1} parent=0 // pred_check_branch
    %186 = sbr.rel (0) target = $region29
  $region28: #{dqn_forward.1} parent=0 // pred_region
    _
  $region29: #{dqn_forward.1} parent=0 // pred_fallthru
    _

</llo_original>
